<compile_context>
chip_gen: v7x
topology: tpu7x:2x2x1
jax: 0.10.0
libtpu: 0.0.40
codegen_flags: <defaults>
</compile_context>

<pallas_src>
import functools

import numpy as np
import jax
import jax.numpy as jnp
from jax.experimental import pallas as pl
from jax.experimental.pallas import tpu as pltpu


def _lstm_gen_cell_kernel(h_lang_ref, v_hat_ref, h2_ref, c2_ref, w_ref, b_ref,
                          h_out_ref, c_out_ref, *, lang, joint, hidden_chunk):
    L, J, Hc = lang, joint, hidden_chunk

    w = w_ref[...]                      # [L+J+H, 4*Hc] in the prepared (bf16) dtype
    cd = w.dtype

    # Concat-free fused gate matmul: three MXU pushes against contiguous,
    # 128-aligned row-slices of the stacked weight, one shared f32 accumulator.
    # Both operands are bf16 (bf16 MXU path on v6e/v7x, halved HBM weight
    # traffic everywhere); accumulation is forced to f32.
    gates = jnp.dot(h_lang_ref[...].astype(cd), w[:L, :],
                    preferred_element_type=jnp.float32)
    gates = gates + jnp.dot(v_hat_ref[...].astype(cd), w[L:L + J, :],
                            preferred_element_type=jnp.float32)
    gates = gates + jnp.dot(h2_ref[...].astype(cd), w[L + J:, :],
                            preferred_element_type=jnp.float32)
    gates = gates + b_ref[...]          # bias folded + stored f32 at prep time

    # Gate nonlinearities + cell update in f32 (v5e has no bf16 VPU/EUP path).
    # With Hc a multiple of 128 these slices are lane-aligned (no masked ops).
    i_g = jax.nn.sigmoid(gates[:, 0 * Hc:1 * Hc])
    f_g = jax.nn.sigmoid(gates[:, 1 * Hc:2 * Hc])
    g_g = jnp.tanh(gates[:, 2 * Hc:3 * Hc])
    o_g = jax.nn.sigmoid(gates[:, 3 * Hc:4 * Hc])

    c_prev = c2_ref[...].astype(jnp.float32)
    c_out = f_g * c_prev + i_g * g_g
    h_out = o_g * jnp.tanh(c_out)

    h_out_ref[...] = h_out.astype(h_out_ref.dtype)
    c_out_ref[...] = c_out.astype(c_out_ref.dtype)


def prepare_lstm_cell_params(w_ih, w_hh, b_ih, b_hh, *,
                             weight_dtype=jnp.bfloat16, hidden_chunk=None):
    """One-time parameter prep (do at model init, NOT per decode step).

    w_ih: [4H, L+J], w_hh: [4H, H], b_ih/b_hh: [4H]  (PyTorch LSTMCell shapes).

    Returns:
      * stacked weight [L+J+H, 4H] in `weight_dtype` (bf16 by default: halves
        the per-step HBM weight fetch, which dominates at decode shapes),
        with columns permuted hidden-chunk-major so each chunk of `hidden_chunk`
        units owns a contiguous [K, 4*hidden_chunk] slab (i|f|g|o for its units);
      * folded bias [1, 4H] in f32, permuted identically.
    """
    four_h, _ = w_ih.shape
    hidden = four_h // 4
    if hidden_chunk is None:
        hidden_chunk = hidden
    assert hidden % hidden_chunk == 0, "hidden_chunk must divide hidden_size"
    n_chunks = hidden // hidden_chunk

    w = jnp.concatenate([w_ih, w_hh], axis=1).T      # [(L+J)+H, 4H], gate-major cols
    b = b_ih + b_hh                                  # [4H]

    # Gate-major (i|f|g|o, each H wide) -> hidden-chunk-major column order.
    gate = np.arange(4)[None, :, None]
    chunk = np.arange(n_chunks)[:, None, None]
    off = np.arange(hidden_chunk)[None, None, :]
    perm = (gate * hidden + chunk * hidden_chunk + off).reshape(-1)

    return {
        "w": w[:, perm].astype(weight_dtype),
        "b": b[perm].reshape(1, -1).astype(jnp.float32),
        "hidden_chunk": int(hidden_chunk),
    }


def language_generation_lstm_forward(h2, c2, h_lang_enc, v_hat, prepared, *,
                                     block_b=512, donate_c2=False):
    """Pallas equivalent of LanguageGenerationLSTM.forward.

    Args:
      h2, c2:      [B, H] previous hidden / cell state (keep c2 in f32).
      h_lang_enc:  [B, L] language-encoding LSTM hidden state.
      v_hat:       [B, J] attended joint image embedding.
      prepared:    dict from prepare_lstm_cell_params.
      donate_c2:   if True, alias the c2 HBM buffer into c_out (caller must
                   not re-read c2 after the call).
    Returns:
      (h_out, c_out), each [B, H].
    """
    B, H = h2.shape
    L = h_lang_enc.shape[1]
    J = v_hat.shape[1]
    K = L + J + H
    Hc = prepared["hidden_chunk"]
    n_hc = H // Hc
    w = prepared["w"]
    b = prepared["b"]

    # Batch tiling: full batch if small; 512-row tiles for training-sized
    # batches (mem-bound op -> bigger tiles get closer to HBM roofline).
    bt = B if B <= block_b else block_b
    grid = (pl.cdiv(B, bt), n_hc)

    kernel = functools.partial(_lstm_gen_cell_kernel,
                               lang=L, joint=J, hidden_chunk=Hc)

    h_out, c_out = pl.pallas_call(
        kernel,
        grid=grid,
        in_specs=[
            pl.BlockSpec((bt, L), lambda i, h: (i, 0)),       # h_lang_enc (batch-tiled)
            pl.BlockSpec((bt, J), lambda i, h: (i, 0)),       # v_hat      (batch-tiled)
            pl.BlockSpec((bt, H), lambda i, h: (i, 0)),       # h2 (full hidden: gates need all of it)
            pl.BlockSpec((bt, Hc), lambda i, h: (i, h)),      # c2 (hidden-chunked)
            pl.BlockSpec((K, 4 * Hc), lambda i, h: (0, h)),   # stacked bf16 weight slab
            pl.BlockSpec((1, 4 * Hc), lambda i, h: (0, h)),   # folded f32 bias slab
        ],
        out_specs=(
            pl.BlockSpec((bt, Hc), lambda i, h: (i, h)),
            pl.BlockSpec((bt, Hc), lambda i, h: (i, h)),
        ),
        out_shape=(
            jax.ShapeDtypeStruct((B, H), h2.dtype),
            jax.ShapeDtypeStruct((B, H), c2.dtype),           # keep c-state f32
        ),
        input_output_aliases=({3: 1} if donate_c2 else {}),
        compiler_params=pltpu.CompilerParams(
            # Both axes independent: batch tiles and hidden chunks split across
            # v7x's two TensorCores even when the batch axis has one tile.
            dimension_semantics=("parallel", "parallel"),
        ),
    )(h_lang_enc, v_hat, h2, c2, w, b)
    return h_out, c_out


def _reference_forward(h2, c2, h_lang_enc, v_hat, w_ih, w_hh, b_ih, b_hh,
                       compute_dtype=jnp.float32):
    """Pure-JAX reference matching the PyTorch module; compute_dtype controls
    operand precision of the two matmuls (f32 = exact module semantics,
    bf16 = quantization-matched to the Pallas kernel's MXU path)."""
    cd = compute_dtype
    x = jnp.concatenate([h_lang_enc, v_hat], axis=1)
    gates = (jnp.dot(x.astype(cd), w_ih.T.astype(cd),
                     preferred_element_type=jnp.float32)
             + jnp.dot(h2.astype(cd), w_hh.T.astype(cd),
                       preferred_element_type=jnp.float32)
             + (b_ih + b_hh).astype(jnp.float32))
    H = h2.shape[1]
    i_g = jax.nn.sigmoid(gates[:, 0 * H:1 * H])
    f_g = jax.nn.sigmoid(gates[:, 1 * H:2 * H])
    g_g = jnp.tanh(gates[:, 2 * H:3 * H])
    o_g = jax.nn.sigmoid(gates[:, 3 * H:4 * H])
    c_out = f_g * c2.astype(jnp.float32) + i_g * g_g
    h_out = o_g * jnp.tanh(c_out)
    return h_out.astype(h2.dtype), c_out.astype(c2.dtype)


if __name__ == "__main__":
    BATCH = 16        # multiple of 16: full sublane packing for bf16 activations
    LANG = 128        # language_encoding_lstm_size
    JOINT = 128       # joint_embed_size
    HIDDEN = 128      # hidden_size (lane-aligned: gate slices / stores full-lane)
    IN_FEATURES = LANG + JOINT

    key = jax.random.PRNGKey(0)
    k = jax.random.split(key, 8)

    # Deterministic synthetic LSTMCell parameters (PyTorch shapes).
    w_ih = jax.random.uniform(k[0], (4 * HIDDEN, IN_FEATURES), jnp.float32, -0.1, 0.1)
    w_hh = jax.random.uniform(k[1], (4 * HIDDEN, HIDDEN), jnp.float32, -0.1, 0.1)
    b_ih = jax.random.uniform(k[2], (4 * HIDDEN,), jnp.float32, -0.1, 0.1)
    b_hh = jax.random.uniform(k[3], (4 * HIDDEN,), jnp.float32, -0.1, 0.1)

    h2 = jax.random.normal(k[4], (BATCH, HIDDEN), jnp.float32)
    c2 = jax.random.normal(k[5], (BATCH, HIDDEN), jnp.float32)
    h_lang_enc = jax.random.normal(k[6], (BATCH, LANG), jnp.float32)
    v_hat = jax.random.normal(k[7], (BATCH, JOINT), jnp.float32)

    # One-time weight prep (hoisted out of the per-step path): bf16 stacked
    # weight, f32 folded bias, hidden_chunk=H (=> 1 chunk at these sizes).
    prepared = prepare_lstm_cell_params(w_ih, w_hh, b_ih, b_hh)

    h_out, c_out = language_generation_lstm_forward(h2, c2, h_lang_enc, v_hat, prepared)
    jax.block_until_ready((h_out, c_out))

    # 1) Tight check vs. a quantization-matched reference (same bf16 operands,
    #    f32 accumulation and gate math) -> verifies the kernel itself.
    h_q, c_q = _reference_forward(h2, c2, h_lang_enc, v_hat,
                                  w_ih, w_hh, b_ih, b_hh,
                                  compute_dtype=jnp.bfloat16)
    assert jnp.allclose(h_out, h_q, atol=2e-3, rtol=2e-3), "h mismatch (quantized ref)"
    assert jnp.allclose(c_out, c_q, atol=2e-3, rtol=2e-3), "c mismatch (quantized ref)"

    # 2) Loose sanity check vs. the exact f32 PyTorch-semantics reference
    #    (difference is only bf16 weight/activation quantization).
    h_f, c_f = _reference_forward(h2, c2, h_lang_enc, v_hat,
                                  w_ih, w_hh, b_ih, b_hh,
                                  compute_dtype=jnp.float32)
    assert jnp.allclose(h_out, h_f, atol=6e-2), "h drift vs f32 reference"
    assert jnp.allclose(c_out, c_f, atol=6e-2), "c drift vs f32 reference"

    print("KERNEL_OK")
</pallas_src>

<mosaic_0001>
module attributes {stable_mosaic.version = 11 : i64} {
  func.func @_lstm_gen_cell_kernel(%arg0: i32, %arg1: i32, %arg2: memref<16x128xf32, #tpu.memory_space<vmem>>, %arg3: memref<16x128xf32, #tpu.memory_space<vmem>>, %arg4: memref<16x128xf32, #tpu.memory_space<vmem>>, %arg5: memref<16x128xf32, #tpu.memory_space<vmem>>, %arg6: memref<384x512xbf16, #tpu.memory_space<vmem>>, %arg7: memref<1x512xf32, #tpu.memory_space<vmem>>, %arg8: memref<16x128xf32, #tpu.memory_space<vmem>>, %arg9: memref<16x128xf32, #tpu.memory_space<vmem>>) attributes {dimension_semantics = [#tpu.dimension_semantics<parallel>, #tpu.dimension_semantics<parallel>], iteration_bounds = array<i64: 1, 1>, scalar_prefetch = 0 : i64, scratch_operands = 0 : i64, tpu.core_type = #tpu.core_type<tc>, window_params = [{transform_indices = @transform_0, window_bounds = array<i64: 16, 128>}, {transform_indices = @transform_1, window_bounds = array<i64: 16, 128>}, {transform_indices = @transform_2, window_bounds = array<i64: 16, 128>}, {transform_indices = @transform_3, window_bounds = array<i64: 16, 128>}, {transform_indices = @transform_4, window_bounds = array<i64: 384, 512>}, {transform_indices = @transform_5, window_bounds = array<i64: 1, 512>}, {transform_indices = @transform_6, window_bounds = array<i64: 16, 128>}, {transform_indices = @transform_7, window_bounds = array<i64: 16, 128>}]} {
    %c0 = arith.constant 0 : index
    %c0_0 = arith.constant 0 : index
    %0 = vector.load %arg6[%c0, %c0_0] : memref<384x512xbf16, #tpu.memory_space<vmem>>, vector<384x512xbf16>
    %c0_1 = arith.constant 0 : index
    %c0_2 = arith.constant 0 : index
    %1 = vector.load %arg2[%c0_1, %c0_2] : memref<16x128xf32, #tpu.memory_space<vmem>>, vector<16x128xf32>
    %2 = arith.truncf %1 : vector<16x128xf32> to vector<16x128xbf16>
    %3 = vector.extract_strided_slice %0 {offsets = [0, 0], sizes = [128, 512], strides = [1, 1]} : vector<384x512xbf16> to vector<128x512xbf16>
    %cst = arith.constant dense<0.000000e+00> : vector<16x512xf32>
    %4 = tpu.matmul %2, %3, %cst {dimension_numbers = #tpu.dot_dimension_numbers<[1], [0], [0], [1], [0, 0, 1, 1], [], []>} : vector<16x128xbf16>, vector<128x512xbf16>, vector<16x512xf32> -> vector<16x512xf32>
    %c0_3 = arith.constant 0 : index
    %c0_4 = arith.constant 0 : index
    %5 = vector.load %arg3[%c0_3, %c0_4] : memref<16x128xf32, #tpu.memory_space<vmem>>, vector<16x128xf32>
    %6 = arith.truncf %5 : vector<16x128xf32> to vector<16x128xbf16>
    %7 = vector.extract_strided_slice %0 {offsets = [128, 0], sizes = [128, 512], strides = [1, 1]} : vector<384x512xbf16> to vector<128x512xbf16>
    %cst_5 = arith.constant dense<0.000000e+00> : vector<16x512xf32>
    %8 = tpu.matmul %6, %7, %cst_5 {dimension_numbers = #tpu.dot_dimension_numbers<[1], [0], [0], [1], [0, 0, 1, 1], [], []>} : vector<16x128xbf16>, vector<128x512xbf16>, vector<16x512xf32> -> vector<16x512xf32>
    %9 = arith.addf %4, %8 : vector<16x512xf32>
    %c0_6 = arith.constant 0 : index
    %c0_7 = arith.constant 0 : index
    %10 = vector.load %arg4[%c0_6, %c0_7] : memref<16x128xf32, #tpu.memory_space<vmem>>, vector<16x128xf32>
    %11 = arith.truncf %10 : vector<16x128xf32> to vector<16x128xbf16>
    %12 = vector.extract_strided_slice %0 {offsets = [256, 0], sizes = [128, 512], strides = [1, 1]} : vector<384x512xbf16> to vector<128x512xbf16>
    %cst_8 = arith.constant dense<0.000000e+00> : vector<16x512xf32>
    %13 = tpu.matmul %11, %12, %cst_8 {dimension_numbers = #tpu.dot_dimension_numbers<[1], [0], [0], [1], [0, 0, 1, 1], [], []>} : vector<16x128xbf16>, vector<128x512xbf16>, vector<16x512xf32> -> vector<16x512xf32>
    %14 = arith.addf %9, %13 : vector<16x512xf32>
    %c0_9 = arith.constant 0 : index
    %c0_10 = arith.constant 0 : index
    %15 = vector.load %arg7[%c0_9, %c0_10] : memref<1x512xf32, #tpu.memory_space<vmem>>, vector<1x512xf32>
    %16 = vector.broadcast %15 : vector<1x512xf32> to vector<16x512xf32>
    %17 = arith.addf %14, %16 : vector<16x512xf32>
    %18 = vector.extract_strided_slice %17 {offsets = [0, 0], sizes = [16, 128], strides = [1, 1]} : vector<16x512xf32> to vector<16x128xf32>
    %19 = arith.negf %18 : vector<16x128xf32>
    %20 = math.exp %19 : vector<16x128xf32>
    %cst_11 = arith.constant 1.000000e+00 : f32
    %21 = vector.broadcast %cst_11 : f32 to vector<16x128xf32>
    %22 = arith.addf %21, %20 : vector<16x128xf32>
    %23 = arith.divf %21, %22 : vector<16x128xf32>
    %24 = vector.extract_strided_slice %17 {offsets = [0, 128], sizes = [16, 128], strides = [1, 1]} : vector<16x512xf32> to vector<16x128xf32>
    %25 = arith.negf %24 : vector<16x128xf32>
    %26 = math.exp %25 : vector<16x128xf32>
    %cst_12 = arith.constant 1.000000e+00 : f32
    %27 = vector.broadcast %cst_12 : f32 to vector<16x128xf32>
    %28 = arith.addf %27, %26 : vector<16x128xf32>
    %29 = arith.divf %27, %28 : vector<16x128xf32>
    %30 = vector.extract_strided_slice %17 {offsets = [0, 256], sizes = [16, 128], strides = [1, 1]} : vector<16x512xf32> to vector<16x128xf32>
    %31 = math.tanh %30 : vector<16x128xf32>
    %32 = vector.extract_strided_slice %17 {offsets = [0, 384], sizes = [16, 128], strides = [1, 1]} : vector<16x512xf32> to vector<16x128xf32>
    %33 = arith.negf %32 : vector<16x128xf32>
    %34 = math.exp %33 : vector<16x128xf32>
    %cst_13 = arith.constant 1.000000e+00 : f32
    %35 = vector.broadcast %cst_13 : f32 to vector<16x128xf32>
    %36 = arith.addf %35, %34 : vector<16x128xf32>
    %37 = arith.divf %35, %36 : vector<16x128xf32>
    %c0_14 = arith.constant 0 : index
    %c0_15 = arith.constant 0 : index
    %38 = vector.load %arg5[%c0_14, %c0_15] : memref<16x128xf32, #tpu.memory_space<vmem>>, vector<16x128xf32>
    %39 = arith.mulf %29, %38 : vector<16x128xf32>
    %40 = arith.mulf %23, %31 : vector<16x128xf32>
    %41 = arith.addf %39, %40 : vector<16x128xf32>
    %42 = math.tanh %41 : vector<16x128xf32>
    %43 = arith.mulf %37, %42 : vector<16x128xf32>
    %c0_16 = arith.constant 0 : index
    %c0_17 = arith.constant 0 : index
    %44 = vector.load %arg8[%c0_16, %c0_17] : memref<16x128xf32, #tpu.memory_space<vmem>>, vector<16x128xf32>
    tpu.vector_store %arg8[%c0_16, %c0_17], %43 {strides = array<i32>} : memref<16x128xf32, #tpu.memory_space<vmem>>, vector<16x128xf32>,
    %c0_18 = arith.constant 0 : index
    %c0_19 = arith.constant 0 : index
    %45 = vector.load %arg9[%c0_18, %c0_19] : memref<16x128xf32, #tpu.memory_space<vmem>>, vector<16x128xf32>
    tpu.vector_store %arg9[%c0_18, %c0_19], %41 {strides = array<i32>} : memref<16x128xf32, #tpu.memory_space<vmem>>, vector<16x128xf32>,
    return
  }
  func.func @transform_0(%arg0: i32, %arg1: i32) -> (i32, i32) {
    %c0_i32 = arith.constant 0 : i32
    %c0_i32_0 = arith.constant 0 : i32
    return %arg0, %c0_i32 : i32, i32
  }
  func.func @transform_1(%arg0: i32, %arg1: i32) -> (i32, i32) {
    %c0_i32 = arith.constant 0 : i32
    %c0_i32_0 = arith.constant 0 : i32
    return %arg0, %c0_i32 : i32, i32
  }
  func.func @transform_2(%arg0: i32, %arg1: i32) -> (i32, i32) {
    %c0_i32 = arith.constant 0 : i32
    %c0_i32_0 = arith.constant 0 : i32
    return %arg0, %c0_i32 : i32, i32
  }
  func.func @transform_3(%arg0: i32, %arg1: i32) -> (i32, i32) {
    %c0_i32 = arith.constant 0 : i32
    return %arg0, %arg1 : i32, i32
  }
  func.func @transform_4(%arg0: i32, %arg1: i32) -> (i32, i32) {
    %c0_i32 = arith.constant 0 : i32
    %c0_i32_0 = arith.constant 0 : i32
    return %c0_i32, %arg1 : i32, i32
  }
  func.func @transform_5(%arg0: i32, %arg1: i32) -> (i32, i32) {
    %c0_i32 = arith.constant 0 : i32
    %c0_i32_0 = arith.constant 0 : i32
    return %c0_i32, %arg1 : i32, i32
  }
  func.func @transform_6(%arg0: i32, %arg1: i32) -> (i32, i32) {
    %c0_i32 = arith.constant 0 : i32
    return %arg0, %arg1 : i32, i32
  }
  func.func @transform_7(%arg0: i32, %arg1: i32) -> (i32, i32) {
    %c0_i32 = arith.constant 0 : i32
    return %arg0, %arg1 : i32, i32
  }
}

</mosaic_0001>

<llo_original>
// kernel: tpu_custom_call.1
$region0: #{tpu_custom_call.1}
  #allocation0 [shape = 'u32[]', space=smem, size = 0x4, offset = 0x4, fixed_abs, tag = 'smem constant byte address 0x4 - core index']
  #allocation1 [shape = 'u32[144,128]{1,0:T(1,128)}', space=vmem, size = 0x12000, scoped, tag = 'internal scratch']
  %s0 = inlined_call_operand.hbm [shape: f32[16,128], index: 0, kind: input, shape index: {}]
  %s1 = inlined_call_operand.hbm [shape: f32[16,128], index: 1, kind: input, shape index: {}]
  %s2 = inlined_call_operand.hbm [shape: f32[16,128], index: 2, kind: input, shape index: {}]
  %s3 = inlined_call_operand.hbm [shape: f32[16,128], index: 3, kind: input, shape index: {}]
  %s4 = inlined_call_operand.hbm [shape: bf16[384,512], index: 4, kind: input, shape index: {}]
  %s5 = inlined_call_operand.vmem [shape: f32[1,512], index: 5, kind: input, shape index: {}]
  %s6 = inlined_call_operand.hbm [shape: f32[16,128], index: 6, kind: output, shape index: {0}]
  %s7 = inlined_call_operand.hbm [shape: f32[16,128], index: 7, kind: output, shape index: {1}]
  %8 = xla_tuple %s6, %s7
  %s9 = sld [smem:[#allocation0]]
  $region62: #{tpu_custom_call.1} parent=0
    _
  %s11 = ssub.s32 1, %s9
  %s12 = scalar_select 0, %s11, %s9
  $region1: #{tpu_custom_call.1} parent=0
    #allocation2 [shape = 'u8[8192]{0}', space=vmem, size = 0x2000, scoped, tag = 'input window, operand 0, single buffered']
    #allocation3 [shape = 's32[1]{0}', space=sflag, size = 0x4, scoped, tag = 'scoped memory for tpu_custom_call.1']
    #allocation4 [shape = 's32[1]{0}', space=sflag, size = 0x4, scoped, tag = 'scoped memory for tpu_custom_call.1']
    #allocation5 [shape = 'u8[8192]{0}', space=vmem, size = 0x2000, scoped, tag = 'input window, operand 1, single buffered']
    #allocation6 [shape = 's32[1]{0}', space=sflag, size = 0x4, scoped, tag = 'scoped memory for tpu_custom_call.1']
    #allocation7 [shape = 'u8[8192]{0}', space=vmem, size = 0x2000, scoped, tag = 'input window, operand 2, single buffered']
    #allocation8 [shape = 'u8[8192]{0}', space=vmem, size = 0x2000, scoped, tag = 'input window, operand 3, single buffered']
    #allocation9 [shape = 's32[1]{0}', space=sflag, size = 0x4, scoped, tag = 'scoped memory for tpu_custom_call.1']
    #allocation10 [shape = 'u8[393216]{0}', space=vmem, size = 0x60000, scoped, tag = 'input window, operand 4, single buffered']
    #allocation11 [shape = 'u8[8192]{0}', space=vmem, size = 0x2000, scoped, tag = 'output window, operand 0, single buffered']
    #allocation12 [shape = 'u8[8192]{0}', space=vmem, size = 0x2000, scoped, tag = 'output window, operand 1, single buffered']
    #allocation13 [shape = 's32[1]{0}', space=sflag, size = 0x4, scoped, tag = 'scoped memory for tpu_custom_call.1']
    %13 = vsyncpa [#allocation3], 0
    %14 = vsyncpa [#allocation6], 0
    %15 = vsyncpa [#allocation9], 0
    %16 = vsyncpa [#allocation4], 0
    %17 = vsyncpa [#allocation13], 0
    // Predicated region
    $region2: #{tpu_custom_call.1} parent=1 // pred_check
      _
    $region3: #{tpu_custom_call.1} parent=1 // pred_check_branch
      %19 = sbr.rel (0) target = $region5
    $region4: #{tpu_custom_call.1} parent=1 // pred_region
      %s21 = ssub.s32 256, 256
      %22 = vsyncadd [#allocation3], %s21
      %s23 = sshll.u32 [#allocation2], 4
      %s24 = int_to_ptr.vmem [resolvable:$true] %s23
      %29 = dma.hbm_to_vmem [thread:$0]  %s0, 256, %s24, [#allocation3], 128, 128, 8
    $region5: #{tpu_custom_call.1} parent=1 // pred_fallthru
      _
    // Predicated region
    $region6: #{tpu_custom_call.1} parent=1 // pred_check
      _
    $region7: #{tpu_custom_call.1} parent=1 // pred_check_branch
      %31 = sbr.rel (0) target = $region9
    $region8: #{tpu_custom_call.1} parent=1 // pred_region
      %s33 = ssub.s32 256, 256
      %34 = vsyncadd [#allocation6], %s33
      %s35 = sshll.u32 [#allocation5], 4
      %s36 = int_to_ptr.vmem [resolvable:$true] %s35
      %41 = dma.hbm_to_vmem [thread:$0]  %s1, 256, %s36, [#allocation6], 128, 128, 8
    $region9: #{tpu_custom_call.1} parent=1 // pred_fallthru
      _
    // Predicated region
    $region10: #{tpu_custom_call.1} parent=1 // pred_check
      _
    $region11: #{tpu_custom_call.1} parent=1 // pred_check_branch
      %43 = sbr.rel (0) target = $region13
    $region12: #{tpu_custom_call.1} parent=1 // pred_region
      %s45 = ssub.s32 256, 256
      %46 = vsyncadd [#allocation6], %s45
      %s47 = sshll.u32 [#allocation7], 4
      %s48 = int_to_ptr.vmem [resolvable:$true] %s47
      %53 = dma.hbm_to_vmem [thread:$0]  %s2, 256, %s48, [#allocation6], 128, 128, 8
    $region13: #{tpu_custom_call.1} parent=1 // pred_fallthru
      _
    // Predicated region
    $region14: #{tpu_custom_call.1} parent=1 // pred_check
      _
    $region15: #{tpu_custom_call.1} parent=1 // pred_check_branch
      %55 = sbr.rel (0) target = $region17
    $region16: #{tpu_custom_call.1} parent=1 // pred_region
      %s57 = ssub.s32 256, 256
      %58 = vsyncadd [#allocation9], %s57
      %s59 = sshll.u32 [#allocation8], 4
      %s60 = int_to_ptr.vmem [resolvable:$true] %s59
      %65 = dma.hbm_to_vmem [thread:$0]  %s3, 256, %s60, [#allocation9], 128, 128, 8
    $region17: #{tpu_custom_call.1} parent=1 // pred_fallthru
      _
    // Predicated region
    $region18: #{tpu_custom_call.1} parent=1 // pred_check
      _
    $region19: #{tpu_custom_call.1} parent=1 // pred_check_branch
      %67 = sbr.rel (0) target = $region21
    $region20: #{tpu_custom_call.1} parent=1 // pred_region
      %s69 = ssub.s32 12288, 12288
      %70 = vsyncadd [#allocation9], %s69
      %s71 = sshll.u32 [#allocation10], 4
      %s72 = int_to_ptr.vmem [resolvable:$true] %s71
      %77 = dma.hbm_to_vmem [thread:$0]  %s4, 12288, %s72, [#allocation9], 256, 256, 16
    $region21: #{tpu_custom_call.1} parent=1 // pred_fallthru
      _
    // Predicated region
    $region22: #{tpu_custom_call.1} parent=1 // pred_check
      _
    $region23: #{tpu_custom_call.1} parent=1 // pred_check_branch
      %79 = sbr.rel (0) target = $region25
    $region24: #{tpu_custom_call.1} parent=1 // pred_region
      _
    $region25: #{tpu_custom_call.1} parent=1 // pred_fallthru
      _
    // Predicated region
    $region26: #{tpu_custom_call.1} parent=1 // pred_check
      _
    $region27: #{tpu_custom_call.1} parent=1 // pred_check_branch
      %81 = sbr.rel (0) target = $region29
    $region28: #{tpu_custom_call.1} parent=1 // pred_region
      %82 = dma.done [#allocation3], 256
    $region29: #{tpu_custom_call.1} parent=1 // pred_fallthru
      _
    // Predicated region
    $region30: #{tpu_custom_call.1} parent=1 // pred_check
      _
    $region31: #{tpu_custom_call.1} parent=1 // pred_check_branch
      %84 = sbr.rel (0) target = $region33
    $region32: #{tpu_custom_call.1} parent=1 // pred_region
      %85 = dma.done [#allocation6], 256
    $region33: #{tpu_custom_call.1} parent=1 // pred_fallthru
      _
    // Predicated region
    $region34: #{tpu_custom_call.1} parent=1 // pred_check
      _
    $region35: #{tpu_custom_call.1} parent=1 // pred_check_branch
      %87 = sbr.rel (0) target = $region37
    $region36: #{tpu_custom_call.1} parent=1 // pred_region
      %88 = dma.done [#allocation6], 256
    $region37: #{tpu_custom_call.1} parent=1 // pred_fallthru
      _
    // Predicated region
    $region38: #{tpu_custom_call.1} parent=1 // pred_check
      _
    $region39: #{tpu_custom_call.1} parent=1 // pred_check_branch
      %90 = sbr.rel (0) target = $region41
    $region40: #{tpu_custom_call.1} parent=1 // pred_region
      %91 = dma.done [#allocation9], 256
    $region41: #{tpu_custom_call.1} parent=1 // pred_fallthru
      _
    // Predicated region
    $region42: #{tpu_custom_call.1} parent=1 // pred_check
      _
    $region43: #{tpu_custom_call.1} parent=1 // pred_check_branch
      %93 = sbr.rel (0) target = $region45
    $region44: #{tpu_custom_call.1} parent=1 // pred_region
      %94 = dma.done [#allocation9], 12288
    $region45: #{tpu_custom_call.1} parent=1 // pred_fallthru
      _
    %v96 = vld [vmem:[#allocation10] sm:$0xff]
    %v97 = vld [vmem:[#allocation10 + $0x8] sm:$0xff]
    %v98 = vld [vmem:[#allocation10 + $0x10] sm:$0xff]
    %v99 = vld [vmem:[#allocation10 + $0x18] sm:$0xff]
    %v100 = vld [vmem:[#allocation10 + $0x20] sm:$0xff]
    %v101 = vld [vmem:[#allocation10 + $0x28] sm:$0xff]
    %v102 = vld [vmem:[#allocation10 + $0x30] sm:$0xff]
    %v103 = vld [vmem:[#allocation10 + $0x38] sm:$0xff]
    %v104 = vld [vmem:[#allocation10 + $0x40] sm:$0xff]
    %v105 = vld [vmem:[#allocation10 + $0x48] sm:$0xff]
    %v106 = vld [vmem:[#allocation10 + $0x50] sm:$0xff]
    %v107 = vld [vmem:[#allocation10 + $0x58] sm:$0xff]
    %v108 = vld [vmem:[#allocation10 + $0x60] sm:$0xff]
    %v109 = vld [vmem:[#allocation10 + $0x68] sm:$0xff]
    %v110 = vld [vmem:[#allocation10 + $0x70] sm:$0xff]
    %v111 = vld [vmem:[#allocation10 + $0x78] sm:$0xff]
    %v112 = vld [vmem:[#allocation10 + $0x80] sm:$0xff]
    %v113 = vld [vmem:[#allocation10 + $0x88] sm:$0xff]
    %v114 = vld [vmem:[#allocation10 + $0x90] sm:$0xff]
    %v115 = vld [vmem:[#allocation10 + $0x98] sm:$0xff]
    %v116 = vld [vmem:[#allocation10 + $0xa0] sm:$0xff]
    %v117 = vld [vmem:[#allocation10 + $0xa8] sm:$0xff]
    %v118 = vld [vmem:[#allocation10 + $0xb0] sm:$0xff]
    %v119 = vld [vmem:[#allocation10 + $0xb8] sm:$0xff]
    %v120 = vld [vmem:[#allocation10 + $0xc0] sm:$0xff]
    %v121 = vld [vmem:[#allocation10 + $0xc8] sm:$0xff]
    %v122 = vld [vmem:[#allocation10 + $0xd0] sm:$0xff]
    %v123 = vld [vmem:[#allocation10 + $0xd8] sm:$0xff]
    %v124 = vld [vmem:[#allocation10 + $0xe0] sm:$0xff]
    %v125 = vld [vmem:[#allocation10 + $0xe8] sm:$0xff]
    %v126 = vld [vmem:[#allocation10 + $0xf0] sm:$0xff]
    %v127 = vld [vmem:[#allocation10 + $0xf8] sm:$0xff]
    %v128 = vld [vmem:[#allocation10 + $0x100] sm:$0xff]
    %v129 = vld [vmem:[#allocation10 + $0x108] sm:$0xff]
    %v130 = vld [vmem:[#allocation10 + $0x110] sm:$0xff]
    %v131 = vld [vmem:[#allocation10 + $0x118] sm:$0xff]
    %v132 = vld [vmem:[#allocation10 + $0x120] sm:$0xff]
    %v133 = vld [vmem:[#allocation10 + $0x128] sm:$0xff]
    %v134 = vld [vmem:[#allocation10 + $0x130] sm:$0xff]
    %v135 = vld [vmem:[#allocation10 + $0x138] sm:$0xff]
    %v136 = vld [vmem:[#allocation10 + $0x140] sm:$0xff]
    %v137 = vld [vmem:[#allocation10 + $0x148] sm:$0xff]
    %v138 = vld [vmem:[#allocation10 + $0x150] sm:$0xff]
    %v139 = vld [vmem:[#allocation10 + $0x158] sm:$0xff]
    %v140 = vld [vmem:[#allocation10 + $0x160] sm:$0xff]
    %v141 = vld [vmem:[#allocation10 + $0x168] sm:$0xff]
    %v142 = vld [vmem:[#allocation10 + $0x170] sm:$0xff]
    %v143 = vld [vmem:[#allocation10 + $0x178] sm:$0xff]
    %v144 = vld [vmem:[#allocation10 + $0x180] sm:$0xff]
    %v145 = vld [vmem:[#allocation10 + $0x188] sm:$0xff]
    %v146 = vld [vmem:[#allocation10 + $0x190] sm:$0xff]
    %v147 = vld [vmem:[#allocation10 + $0x198] sm:$0xff]
    %v148 = vld [vmem:[#allocation10 + $0x1a0] sm:$0xff]
    %v149 = vld [vmem:[#allocation10 + $0x1a8] sm:$0xff]
    %v150 = vld [vmem:[#allocation10 + $0x1b0] sm:$0xff]
    %v151 = vld [vmem:[#allocation10 + $0x1b8] sm:$0xff]
    %v152 = vld [vmem:[#allocation10 + $0x1c0] sm:$0xff]
    %v153 = vld [vmem:[#allocation10 + $0x1c8] sm:$0xff]
    %v154 = vld [vmem:[#allocation10 + $0x1d0] sm:$0xff]
    %v155 = vld [vmem:[#allocation10 + $0x1d8] sm:$0xff]
    %v156 = vld [vmem:[#allocation10 + $0x1e0] sm:$0xff]
    %v157 = vld [vmem:[#allocation10 + $0x1e8] sm:$0xff]
    %v158 = vld [vmem:[#allocation10 + $0x1f0] sm:$0xff]
    %v159 = vld [vmem:[#allocation10 + $0x1f8] sm:$0xff]
    %v160 = vld [vmem:[#allocation10 + $0x200] sm:$0xff]
    %v161 = vld [vmem:[#allocation10 + $0x208] sm:$0xff]
    %v162 = vld [vmem:[#allocation10 + $0x210] sm:$0xff]
    %v163 = vld [vmem:[#allocation10 + $0x218] sm:$0xff]
    %v164 = vld [vmem:[#allocation10 + $0x220] sm:$0xff]
    %v165 = vld [vmem:[#allocation10 + $0x228] sm:$0xff]
    %v166 = vld [vmem:[#allocation10 + $0x230] sm:$0xff]
    %v167 = vld [vmem:[#allocation10 + $0x238] sm:$0xff]
    %v168 = vld [vmem:[#allocation10 + $0x240] sm:$0xff]
    %v169 = vld [vmem:[#allocation10 + $0x248] sm:$0xff]
    %v170 = vld [vmem:[#allocation10 + $0x250] sm:$0xff]
    %v171 = vld [vmem:[#allocation10 + $0x258] sm:$0xff]
    %v172 = vld [vmem:[#allocation10 + $0x260] sm:$0xff]
    %v173 = vld [vmem:[#allocation10 + $0x268] sm:$0xff]
    %v174 = vld [vmem:[#allocation10 + $0x270] sm:$0xff]
    %v175 = vld [vmem:[#allocation10 + $0x278] sm:$0xff]
    %v176 = vld [vmem:[#allocation10 + $0x280] sm:$0xff]
    %v177 = vld [vmem:[#allocation10 + $0x288] sm:$0xff]
    %v178 = vld [vmem:[#allocation10 + $0x290] sm:$0xff]
    %v179 = vld [vmem:[#allocation10 + $0x298] sm:$0xff]
    %v180 = vld [vmem:[#allocation10 + $0x2a0] sm:$0xff]
    %v181 = vld [vmem:[#allocation10 + $0x2a8] sm:$0xff]
    %v182 = vld [vmem:[#allocation10 + $0x2b0] sm:$0xff]
    %v183 = vld [vmem:[#allocation10 + $0x2b8] sm:$0xff]
    %v184 = vld [vmem:[#allocation10 + $0x2c0] sm:$0xff]
    %v185 = vld [vmem:[#allocation10 + $0x2c8] sm:$0xff]
    %v186 = vld [vmem:[#allocation10 + $0x2d0] sm:$0xff]
    %v187 = vld [vmem:[#allocation10 + $0x2d8] sm:$0xff]
    %v188 = vld [vmem:[#allocation10 + $0x2e0] sm:$0xff]
    %v189 = vld [vmem:[#allocation10 + $0x2e8] sm:$0xff]
    %v190 = vld [vmem:[#allocation10 + $0x2f0] sm:$0xff]
    %v191 = vld [vmem:[#allocation10 + $0x2f8] sm:$0xff]
    %v192 = vld [vmem:[#allocation2] sm:$0xff]
    %v193 = vld [vmem:[#allocation2 + $0x8] sm:$0xff]
    %v194 = vpack.c.bf16 %v193, %v192
    %v195 = vld [vmem:[#allocation5] sm:$0xff]
    %v196 = vld [vmem:[#allocation5 + $0x8] sm:$0xff]
    %v197 = vpack.c.bf16 %v196, %v195
    %v230 = vunpack.c.l.b16 %v128
    %v231 = vunpack.c.h.b16 %v128
    %v232 = vunpack.c.l.b16 %v129
    %v233 = vunpack.c.h.b16 %v129
    %v234 = vunpack.c.l.b16 %v130
    %v235 = vunpack.c.h.b16 %v130
    %v236 = vunpack.c.l.b16 %v131
    %v237 = vunpack.c.h.b16 %v131
    %v238 = vunpack.c.l.b16 %v132
    %v239 = vunpack.c.h.b16 %v132
    %v240 = vunpack.c.l.b16 %v133
    %v241 = vunpack.c.h.b16 %v133
    %v242 = vunpack.c.l.b16 %v134
    %v243 = vunpack.c.h.b16 %v134
    %v244 = vunpack.c.l.b16 %v135
    %v245 = vunpack.c.h.b16 %v135
    %v246 = vunpack.c.l.b16 %v136
    %v247 = vunpack.c.h.b16 %v136
    %v248 = vunpack.c.l.b16 %v137
    %v249 = vunpack.c.h.b16 %v137
    %v250 = vunpack.c.l.b16 %v138
    %v251 = vunpack.c.h.b16 %v138
    %v252 = vunpack.c.l.b16 %v139
    %v253 = vunpack.c.h.b16 %v139
    %v254 = vunpack.c.l.b16 %v140
    %v255 = vunpack.c.h.b16 %v140
    %v256 = vunpack.c.l.b16 %v141
    %v257 = vunpack.c.h.b16 %v141
    %v258 = vunpack.c.l.b16 %v142
    %v259 = vunpack.c.h.b16 %v142
    %v260 = vunpack.c.l.b16 %v143
    %v261 = vunpack.c.h.b16 %v143
    %v262 = vunpack.c.l.b16 %v144
    %v263 = vunpack.c.h.b16 %v144
    %v264 = vunpack.c.l.b16 %v145
    %v265 = vunpack.c.h.b16 %v145
    %v266 = vunpack.c.l.b16 %v146
    %v267 = vunpack.c.h.b16 %v146
    %v268 = vunpack.c.l.b16 %v147
    %v269 = vunpack.c.h.b16 %v147
    %v270 = vunpack.c.l.b16 %v148
    %v271 = vunpack.c.h.b16 %v148
    %v272 = vunpack.c.l.b16 %v149
    %v273 = vunpack.c.h.b16 %v149
    %v274 = vunpack.c.l.b16 %v150
    %v275 = vunpack.c.h.b16 %v150
    %v276 = vunpack.c.l.b16 %v151
    %v277 = vunpack.c.h.b16 %v151
    %v278 = vunpack.c.l.b16 %v152
    %v279 = vunpack.c.h.b16 %v152
    %v280 = vunpack.c.l.b16 %v153
    %v281 = vunpack.c.h.b16 %v153
    %v282 = vunpack.c.l.b16 %v154
    %v283 = vunpack.c.h.b16 %v154
    %v284 = vunpack.c.l.b16 %v155
    %v285 = vunpack.c.h.b16 %v155
    %v286 = vunpack.c.l.b16 %v156
    %v287 = vunpack.c.h.b16 %v156
    %v288 = vunpack.c.l.b16 %v157
    %v289 = vunpack.c.h.b16 %v157
    %v290 = vunpack.c.l.b16 %v158
    %v291 = vunpack.c.h.b16 %v158
    %v292 = vunpack.c.l.b16 %v159
    %v293 = vunpack.c.h.b16 %v159
    %v294 = vpack.c.b16 %v234, %v230
    %v295 = vpack.c.b16 %v235, %v231
    %v296 = vpack.c.b16 %v236, %v232
    %v297 = vpack.c.b16 %v237, %v233
    %v298 = vpack.c.b16 %v242, %v238
    %v299 = vpack.c.b16 %v243, %v239
    %v300 = vpack.c.b16 %v244, %v240
    %v301 = vpack.c.b16 %v245, %v241
    %v302 = vpack.c.b16 %v250, %v246
    %v303 = vpack.c.b16 %v251, %v247
    %v304 = vpack.c.b16 %v252, %v248
    %v305 = vpack.c.b16 %v253, %v249
    %v306 = vpack.c.b16 %v258, %v254
    %v307 = vpack.c.b16 %v259, %v255
    %v308 = vpack.c.b16 %v260, %v256
    %v309 = vpack.c.b16 %v261, %v257
    %v310 = vpack.c.b16 %v266, %v262
    %v311 = vpack.c.b16 %v267, %v263
    %v312 = vpack.c.b16 %v268, %v264
    %v313 = vpack.c.b16 %v269, %v265
    %v314 = vpack.c.b16 %v274, %v270
    %v315 = vpack.c.b16 %v275, %v271
    %v316 = vpack.c.b16 %v276, %v272
    %v317 = vpack.c.b16 %v277, %v273
    %v318 = vpack.c.b16 %v282, %v278
    %v319 = vpack.c.b16 %v283, %v279
    %v320 = vpack.c.b16 %v284, %v280
    %v321 = vpack.c.b16 %v285, %v281
    %v322 = vpack.c.b16 %v290, %v286
    %v323 = vpack.c.b16 %v291, %v287
    %v324 = vpack.c.b16 %v292, %v288
    %v325 = vpack.c.b16 %v293, %v289
    %358 = vmatprep.subr.bf16.mxu0 %v295
    %359 = vmatpush1.bf16.msra.mxu0 %v294
    %360 = vmatprep.subr.bf16.mxu0 %v299
    %361 = vmatpush1.bf16.msra.mxu0 %v298
    %362 = vmatprep.subr.bf16.mxu0 %v303
    %363 = vmatpush1.bf16.msra.mxu0 %v302
    %364 = vmatprep.subr.bf16.mxu0 %v307
    %365 = vmatpush1.bf16.msra.mxu0 %v306
    %366 = vmatprep.subr.bf16.mxu0 %v311
    %367 = vmatpush1.bf16.msra.mxu0 %v310
    %368 = vmatprep.subr.bf16.mxu0 %v315
    %369 = vmatpush1.bf16.msra.mxu0 %v314
    %370 = vmatprep.subr.bf16.mxu0 %v319
    %371 = vmatpush1.bf16.msra.mxu0 %v318
    %372 = vmatprep.subr.bf16.mxu0 %v323
    %373 = vmatpush1.bf16.msra.mxu0 %v322
    %374 = vmatprep.subr.bf16.mxu0 0
    %375 = vmatpush1.bf16.msra.mxu0 0
    %376 = vmatprep.subr.bf16.mxu0 0
    %377 = vmatpush1.bf16.msra.mxu0 0
    %378 = vmatprep.subr.bf16.mxu0 0
    %379 = vmatpush1.bf16.msra.mxu0 0
    %380 = vmatprep.subr.bf16.mxu0 0
    %381 = vmatpush1.bf16.msra.mxu0 0
    %382 = vmatprep.subr.bf16.mxu0 0
    %383 = vmatpush1.bf16.msra.mxu0 0
    %384 = vmatprep.subr.bf16.mxu0 0
    %385 = vmatpush1.bf16.msra.mxu0 0
    %386 = vmatprep.subr.bf16.mxu0 0
    %387 = vmatpush1.bf16.msra.mxu0 0
    %388 = vmatprep.subr.bf16.mxu0 0
    %389 = vmatpush1.bf16.msra.mxu0 0
    %390 = vmatprep.mubr.bf16.mxu0 0
    %391 = vmatmul.mubr.bf16.gmra.mrb[0].mxu0 %v197
    %v392 = vpop.f32.mrb[0].mxu0
    %v393 = vadd.f32 0.0, %v392
    %v394 = vpop.f32.mrb[0].mxu0
    %v395 = vadd.f32 0.0, %v394
    %v396 = vpop.f32.mrb[0].mxu0
    %v397 = vadd.f32 0.0, %v396
    %v398 = vpop.f32.mrb[0].mxu0
    %v399 = vadd.f32 0.0, %v398
    %400 = vdwg.mxu0
    %401 = vmatprep.subr.bf16.mxu0 %v297
    %402 = vmatpush1.bf16.msra.mxu0 %v296
    %403 = vmatprep.subr.bf16.mxu0 %v301
    %404 = vmatpush1.bf16.msra.mxu0 %v300
    %405 = vmatprep.subr.bf16.mxu0 %v305
    %406 = vmatpush1.bf16.msra.mxu0 %v304
    %407 = vmatprep.subr.bf16.mxu0 %v309
    %408 = vmatpush1.bf16.msra.mxu0 %v308
    %409 = vmatprep.subr.bf16.mxu0 %v313
    %410 = vmatpush1.bf16.msra.mxu0 %v312
    %411 = vmatprep.subr.bf16.mxu0 %v317
    %412 = vmatpush1.bf16.msra.mxu0 %v316
    %413 = vmatprep.subr.bf16.mxu0 %v321
    %414 = vmatpush1.bf16.msra.mxu0 %v320
    %415 = vmatprep.subr.bf16.mxu0 %v325
    %416 = vmatpush1.bf16.msra.mxu0 %v324
    %417 = vmatprep.subr.bf16.mxu0 0
    %418 = vmatpush1.bf16.msra.mxu0 0
    %419 = vmatprep.subr.bf16.mxu0 0
    %420 = vmatpush1.bf16.msra.mxu0 0
    %421 = vmatprep.subr.bf16.mxu0 0
    %422 = vmatpush1.bf16.msra.mxu0 0
    %423 = vmatprep.subr.bf16.mxu0 0
    %424 = vmatpush1.bf16.msra.mxu0 0
    %425 = vmatprep.subr.bf16.mxu0 0
    %426 = vmatpush1.bf16.msra.mxu0 0
    %427 = vmatprep.subr.bf16.mxu0 0
    %428 = vmatpush1.bf16.msra.mxu0 0
    %429 = vmatprep.subr.bf16.mxu0 0
    %430 = vmatpush1.bf16.msra.mxu0 0
    %431 = vmatprep.subr.bf16.mxu0 0
    %432 = vmatpush1.bf16.msra.mxu0 0
    %433 = vmatprep.mubr.bf16.mxu0 0
    %434 = vmatmul.mubr.bf16.gmra.mrb[0].mxu0 %v197
    %v435 = vpop.f32.mrb[0].mxu0
    %v436 = vadd.f32 0.0, %v435
    %v437 = vpop.f32.mrb[0].mxu0
    %v438 = vadd.f32 0.0, %v437
    %v439 = vpop.f32.mrb[0].mxu0
    %v440 = vadd.f32 0.0, %v439
    %v441 = vpop.f32.mrb[0].mxu0
    %v442 = vadd.f32 0.0, %v441
    %443 = vdwg.mxu0
    %v476 = vunpack.c.l.b16 %v96
    %v477 = vunpack.c.h.b16 %v96
    %v478 = vunpack.c.l.b16 %v97
    %v479 = vunpack.c.h.b16 %v97
    %v480 = vunpack.c.l.b16 %v98
    %v481 = vunpack.c.h.b16 %v98
    %v482 = vunpack.c.l.b16 %v99
    %v483 = vunpack.c.h.b16 %v99
    %v484 = vunpack.c.l.b16 %v100
    %v485 = vunpack.c.h.b16 %v100
    %v486 = vunpack.c.l.b16 %v101
    %v487 = vunpack.c.h.b16 %v101
    %v488 = vunpack.c.l.b16 %v102
    %v489 = vunpack.c.h.b16 %v102
    %v490 = vunpack.c.l.b16 %v103
    %v491 = vunpack.c.h.b16 %v103
    %v492 = vunpack.c.l.b16 %v104
    %v493 = vunpack.c.h.b16 %v104
    %v494 = vunpack.c.l.b16 %v105
    %v495 = vunpack.c.h.b16 %v105
    %v496 = vunpack.c.l.b16 %v106
    %v497 = vunpack.c.h.b16 %v106
    %v498 = vunpack.c.l.b16 %v107
    %v499 = vunpack.c.h.b16 %v107
    %v500 = vunpack.c.l.b16 %v108
    %v501 = vunpack.c.h.b16 %v108
    %v502 = vunpack.c.l.b16 %v109
    %v503 = vunpack.c.h.b16 %v109
    %v504 = vunpack.c.l.b16 %v110
    %v505 = vunpack.c.h.b16 %v110
    %v506 = vunpack.c.l.b16 %v111
    %v507 = vunpack.c.h.b16 %v111
    %v508 = vunpack.c.l.b16 %v112
    %v509 = vunpack.c.h.b16 %v112
    %v510 = vunpack.c.l.b16 %v113
    %v511 = vunpack.c.h.b16 %v113
    %v512 = vunpack.c.l.b16 %v114
    %v513 = vunpack.c.h.b16 %v114
    %v514 = vunpack.c.l.b16 %v115
    %v515 = vunpack.c.h.b16 %v115
    %v516 = vunpack.c.l.b16 %v116
    %v517 = vunpack.c.h.b16 %v116
    %v518 = vunpack.c.l.b16 %v117
    %v519 = vunpack.c.h.b16 %v117
    %v520 = vunpack.c.l.b16 %v118
    %v521 = vunpack.c.h.b16 %v118
    %v522 = vunpack.c.l.b16 %v119
    %v523 = vunpack.c.h.b16 %v119
    %v524 = vunpack.c.l.b16 %v120
    %v525 = vunpack.c.h.b16 %v120
    %v526 = vunpack.c.l.b16 %v121
    %v527 = vunpack.c.h.b16 %v121
    %v528 = vunpack.c.l.b16 %v122
    %v529 = vunpack.c.h.b16 %v122
    %v530 = vunpack.c.l.b16 %v123
    %v531 = vunpack.c.h.b16 %v123
    %v532 = vunpack.c.l.b16 %v124
    %v533 = vunpack.c.h.b16 %v124
    %v534 = vunpack.c.l.b16 %v125
    %v535 = vunpack.c.h.b16 %v125
    %v536 = vunpack.c.l.b16 %v126
    %v537 = vunpack.c.h.b16 %v126
    %v538 = vunpack.c.l.b16 %v127
    %v539 = vunpack.c.h.b16 %v127
    %v540 = vpack.c.b16 %v480, %v476
    %v541 = vpack.c.b16 %v481, %v477
    %v542 = vpack.c.b16 %v482, %v478
    %v543 = vpack.c.b16 %v483, %v479
    %v544 = vpack.c.b16 %v488, %v484
    %v545 = vpack.c.b16 %v489, %v485
    %v546 = vpack.c.b16 %v490, %v486
    %v547 = vpack.c.b16 %v491, %v487
    %v548 = vpack.c.b16 %v496, %v492
    %v549 = vpack.c.b16 %v497, %v493
    %v550 = vpack.c.b16 %v498, %v494
    %v551 = vpack.c.b16 %v499, %v495
    %v552 = vpack.c.b16 %v504, %v500
    %v553 = vpack.c.b16 %v505, %v501
    %v554 = vpack.c.b16 %v506, %v502
    %v555 = vpack.c.b16 %v507, %v503
    %v556 = vpack.c.b16 %v512, %v508
    %v557 = vpack.c.b16 %v513, %v509
    %v558 = vpack.c.b16 %v514, %v510
    %v559 = vpack.c.b16 %v515, %v511
    %v560 = vpack.c.b16 %v520, %v516
    %v561 = vpack.c.b16 %v521, %v517
    %v562 = vpack.c.b16 %v522, %v518
    %v563 = vpack.c.b16 %v523, %v519
    %v564 = vpack.c.b16 %v528, %v524
    %v565 = vpack.c.b16 %v529, %v525
    %v566 = vpack.c.b16 %v530, %v526
    %v567 = vpack.c.b16 %v531, %v527
    %v568 = vpack.c.b16 %v536, %v532
    %v569 = vpack.c.b16 %v537, %v533
    %v570 = vpack.c.b16 %v538, %v534
    %v571 = vpack.c.b16 %v539, %v535
    %604 = vmatprep.subr.bf16.mxu0 %v541
    %605 = vmatpush1.bf16.msra.mxu0 %v540
    %606 = vmatprep.subr.bf16.mxu0 %v545
    %607 = vmatpush1.bf16.msra.mxu0 %v544
    %608 = vmatprep.subr.bf16.mxu0 %v549
    %609 = vmatpush1.bf16.msra.mxu0 %v548
    %610 = vmatprep.subr.bf16.mxu0 %v553
    %611 = vmatpush1.bf16.msra.mxu0 %v552
    %612 = vmatprep.subr.bf16.mxu0 %v557
    %613 = vmatpush1.bf16.msra.mxu0 %v556
    %614 = vmatprep.subr.bf16.mxu0 %v561
    %615 = vmatpush1.bf16.msra.mxu0 %v560
    %616 = vmatprep.subr.bf16.mxu0 %v565
    %617 = vmatpush1.bf16.msra.mxu0 %v564
    %618 = vmatprep.subr.bf16.mxu0 %v569
    %619 = vmatpush1.bf16.msra.mxu0 %v568
    %620 = vmatprep.subr.bf16.mxu0 0
    %621 = vmatpush1.bf16.msra.mxu0 0
    %622 = vmatprep.subr.bf16.mxu0 0
    %623 = vmatpush1.bf16.msra.mxu0 0
    %624 = vmatprep.subr.bf16.mxu0 0
    %625 = vmatpush1.bf16.msra.mxu0 0
    %626 = vmatprep.subr.bf16.mxu0 0
    %627 = vmatpush1.bf16.msra.mxu0 0
    %628 = vmatprep.subr.bf16.mxu0 0
    %629 = vmatpush1.bf16.msra.mxu0 0
    %630 = vmatprep.subr.bf16.mxu0 0
    %631 = vmatpush1.bf16.msra.mxu0 0
    %632 = vmatprep.subr.bf16.mxu0 0
    %633 = vmatpush1.bf16.msra.mxu0 0
    %634 = vmatprep.subr.bf16.mxu0 0
    %635 = vmatpush1.bf16.msra.mxu0 0
    %636 = vmatprep.mubr.bf16.mxu0 0
    %637 = vmatmul.mubr.bf16.gmra.mrb[0].mxu0 %v194
    %v638 = vpop.f32.mrb[0].mxu0
    %v639 = vadd.f32 %v393, %v638
    %v640 = vpop.f32.mrb[0].mxu0
    %v641 = vadd.f32 %v395, %v640
    %v642 = vpop.f32.mrb[0].mxu0
    %v643 = vadd.f32 %v397, %v642
    %v644 = vpop.f32.mrb[0].mxu0
    %v645 = vadd.f32 %v399, %v644
    %646 = vdwg.mxu0
    %647 = vmatprep.subr.bf16.mxu0 %v543
    %648 = vmatpush1.bf16.msra.mxu0 %v542
    %649 = vmatprep.subr.bf16.mxu0 %v547
    %650 = vmatpush1.bf16.msra.mxu0 %v546
    %651 = vmatprep.subr.bf16.mxu0 %v551
    %652 = vmatpush1.bf16.msra.mxu0 %v550
    %653 = vmatprep.subr.bf16.mxu0 %v555
    %654 = vmatpush1.bf16.msra.mxu0 %v554
    %655 = vmatprep.subr.bf16.mxu0 %v559
    %656 = vmatpush1.bf16.msra.mxu0 %v558
    %657 = vmatprep.subr.bf16.mxu0 %v563
    %658 = vmatpush1.bf16.msra.mxu0 %v562
    %659 = vmatprep.subr.bf16.mxu0 %v567
    %660 = vmatpush1.bf16.msra.mxu0 %v566
    %661 = vmatprep.subr.bf16.mxu0 %v571
    %662 = vmatpush1.bf16.msra.mxu0 %v570
    %663 = vmatprep.subr.bf16.mxu0 0
    %664 = vmatpush1.bf16.msra.mxu0 0
    %665 = vmatprep.subr.bf16.mxu0 0
    %666 = vmatpush1.bf16.msra.mxu0 0
    %667 = vmatprep.subr.bf16.mxu0 0
    %668 = vmatpush1.bf16.msra.mxu0 0
    %669 = vmatprep.subr.bf16.mxu0 0
    %670 = vmatpush1.bf16.msra.mxu0 0
    %671 = vmatprep.subr.bf16.mxu0 0
    %672 = vmatpush1.bf16.msra.mxu0 0
    %673 = vmatprep.subr.bf16.mxu0 0
    %674 = vmatpush1.bf16.msra.mxu0 0
    %675 = vmatprep.subr.bf16.mxu0 0
    %676 = vmatpush1.bf16.msra.mxu0 0
    %677 = vmatprep.subr.bf16.mxu0 0
    %678 = vmatpush1.bf16.msra.mxu0 0
    %679 = vmatprep.mubr.bf16.mxu0 0
    %680 = vmatmul.mubr.bf16.gmra.mrb[0].mxu0 %v194
    %v681 = vpop.f32.mrb[0].mxu0
    %v682 = vadd.f32 %v436, %v681
    %v683 = vpop.f32.mrb[0].mxu0
    %v684 = vadd.f32 %v438, %v683
    %v685 = vpop.f32.mrb[0].mxu0
    %v686 = vadd.f32 %v440, %v685
    %v687 = vpop.f32.mrb[0].mxu0
    %v688 = vadd.f32 %v442, %v687
    %689 = vdwg.mxu0
    %v690 = vld [vmem:[#allocation7] sm:$0xff]
    %v691 = vld [vmem:[#allocation7 + $0x8] sm:$0xff]
    %v692 = vpack.c.bf16 %v691, %v690
    %v725 = vunpack.c.l.b16 %v160
    %v726 = vunpack.c.h.b16 %v160
    %v727 = vunpack.c.l.b16 %v161
    %v728 = vunpack.c.h.b16 %v161
    %v729 = vunpack.c.l.b16 %v162
    %v730 = vunpack.c.h.b16 %v162
    %v731 = vunpack.c.l.b16 %v163
    %v732 = vunpack.c.h.b16 %v163
    %v733 = vunpack.c.l.b16 %v164
    %v734 = vunpack.c.h.b16 %v164
    %v735 = vunpack.c.l.b16 %v165
    %v736 = vunpack.c.h.b16 %v165
    %v737 = vunpack.c.l.b16 %v166
    %v738 = vunpack.c.h.b16 %v166
    %v739 = vunpack.c.l.b16 %v167
    %v740 = vunpack.c.h.b16 %v167
    %v741 = vunpack.c.l.b16 %v168
    %v742 = vunpack.c.h.b16 %v168
    %v743 = vunpack.c.l.b16 %v169
    %v744 = vunpack.c.h.b16 %v169
    %v745 = vunpack.c.l.b16 %v170
    %v746 = vunpack.c.h.b16 %v170
    %v747 = vunpack.c.l.b16 %v171
    %v748 = vunpack.c.h.b16 %v171
    %v749 = vunpack.c.l.b16 %v172
    %v750 = vunpack.c.h.b16 %v172
    %v751 = vunpack.c.l.b16 %v173
    %v752 = vunpack.c.h.b16 %v173
    %v753 = vunpack.c.l.b16 %v174
    %v754 = vunpack.c.h.b16 %v174
    %v755 = vunpack.c.l.b16 %v175
    %v756 = vunpack.c.h.b16 %v175
    %v757 = vunpack.c.l.b16 %v176
    %v758 = vunpack.c.h.b16 %v176
    %v759 = vunpack.c.l.b16 %v177
    %v760 = vunpack.c.h.b16 %v177
    %v761 = vunpack.c.l.b16 %v178
    %v762 = vunpack.c.h.b16 %v178
    %v763 = vunpack.c.l.b16 %v179
    %v764 = vunpack.c.h.b16 %v179
    %v765 = vunpack.c.l.b16 %v180
    %v766 = vunpack.c.h.b16 %v180
    %v767 = vunpack.c.l.b16 %v181
    %v768 = vunpack.c.h.b16 %v181
    %v769 = vunpack.c.l.b16 %v182
    %v770 = vunpack.c.h.b16 %v182
    %v771 = vunpack.c.l.b16 %v183
    %v772 = vunpack.c.h.b16 %v183
    %v773 = vunpack.c.l.b16 %v184
    %v774 = vunpack.c.h.b16 %v184
    %v775 = vunpack.c.l.b16 %v185
    %v776 = vunpack.c.h.b16 %v185
    %v777 = vunpack.c.l.b16 %v186
    %v778 = vunpack.c.h.b16 %v186
    %v779 = vunpack.c.l.b16 %v187
    %v780 = vunpack.c.h.b16 %v187
    %v781 = vunpack.c.l.b16 %v188
    %v782 = vunpack.c.h.b16 %v188
    %v783 = vunpack.c.l.b16 %v189
    %v784 = vunpack.c.h.b16 %v189
    %v785 = vunpack.c.l.b16 %v190
    %v786 = vunpack.c.h.b16 %v190
    %v787 = vunpack.c.l.b16 %v191
    %v788 = vunpack.c.h.b16 %v191
    %v789 = vpack.c.b16 %v729, %v725
    %v790 = vpack.c.b16 %v730, %v726
    %v791 = vpack.c.b16 %v731, %v727
    %v792 = vpack.c.b16 %v732, %v728
    %v793 = vpack.c.b16 %v737, %v733
    %v794 = vpack.c.b16 %v738, %v734
    %v795 = vpack.c.b16 %v739, %v735
    %v796 = vpack.c.b16 %v740, %v736
    %v797 = vpack.c.b16 %v745, %v741
    %v798 = vpack.c.b16 %v746, %v742
    %v799 = vpack.c.b16 %v747, %v743
    %v800 = vpack.c.b16 %v748, %v744
    %v801 = vpack.c.b16 %v753, %v749
    %v802 = vpack.c.b16 %v754, %v750
    %v803 = vpack.c.b16 %v755, %v751
    %v804 = vpack.c.b16 %v756, %v752
    %v805 = vpack.c.b16 %v761, %v757
    %v806 = vpack.c.b16 %v762, %v758
    %v807 = vpack.c.b16 %v763, %v759
    %v808 = vpack.c.b16 %v764, %v760
    %v809 = vpack.c.b16 %v769, %v765
    %v810 = vpack.c.b16 %v770, %v766
    %v811 = vpack.c.b16 %v771, %v767
    %v812 = vpack.c.b16 %v772, %v768
    %v813 = vpack.c.b16 %v777, %v773
    %v814 = vpack.c.b16 %v778, %v774
    %v815 = vpack.c.b16 %v779, %v775
    %v816 = vpack.c.b16 %v780, %v776
    %v817 = vpack.c.b16 %v785, %v781
    %v818 = vpack.c.b16 %v786, %v782
    %v819 = vpack.c.b16 %v787, %v783
    %v820 = vpack.c.b16 %v788, %v784
    %853 = vmatprep.subr.bf16.mxu0 %v790
    %854 = vmatpush1.bf16.msra.mxu0 %v789
    %855 = vmatprep.subr.bf16.mxu0 %v794
    %856 = vmatpush1.bf16.msra.mxu0 %v793
    %857 = vmatprep.subr.bf16.mxu0 %v798
    %858 = vmatpush1.bf16.msra.mxu0 %v797
    %859 = vmatprep.subr.bf16.mxu0 %v802
    %860 = vmatpush1.bf16.msra.mxu0 %v801
    %861 = vmatprep.subr.bf16.mxu0 %v806
    %862 = vmatpush1.bf16.msra.mxu0 %v805
    %863 = vmatprep.subr.bf16.mxu0 %v810
    %864 = vmatpush1.bf16.msra.mxu0 %v809
    %865 = vmatprep.subr.bf16.mxu0 %v814
    %866 = vmatpush1.bf16.msra.mxu0 %v813
    %867 = vmatprep.subr.bf16.mxu0 %v818
    %868 = vmatpush1.bf16.msra.mxu0 %v817
    %869 = vmatprep.subr.bf16.mxu0 0
    %870 = vmatpush1.bf16.msra.mxu0 0
    %871 = vmatprep.subr.bf16.mxu0 0
    %872 = vmatpush1.bf16.msra.mxu0 0
    %873 = vmatprep.subr.bf16.mxu0 0
    %874 = vmatpush1.bf16.msra.mxu0 0
    %875 = vmatprep.subr.bf16.mxu0 0
    %876 = vmatpush1.bf16.msra.mxu0 0
    %877 = vmatprep.subr.bf16.mxu0 0
    %878 = vmatpush1.bf16.msra.mxu0 0
    %879 = vmatprep.subr.bf16.mxu0 0
    %880 = vmatpush1.bf16.msra.mxu0 0
    %881 = vmatprep.subr.bf16.mxu0 0
    %882 = vmatpush1.bf16.msra.mxu0 0
    %883 = vmatprep.subr.bf16.mxu0 0
    %884 = vmatpush1.bf16.msra.mxu0 0
    %885 = vmatprep.mubr.bf16.mxu0 0
    %886 = vmatmul.mubr.bf16.gmra.mrb[0].mxu0 %v692
    %v887 = vpop.f32.mrb[0].mxu0
    %v888 = vadd.f32 0.0, %v887
    %v889 = vpop.f32.mrb[0].mxu0
    %v890 = vadd.f32 0.0, %v889
    %v891 = vpop.f32.mrb[0].mxu0
    %v892 = vadd.f32 0.0, %v891
    %v893 = vpop.f32.mrb[0].mxu0
    %v894 = vadd.f32 0.0, %v893
    %895 = vdwg.mxu0
    %896 = vmatprep.subr.bf16.mxu0 %v792
    %897 = vmatpush1.bf16.msra.mxu0 %v791
    %898 = vmatprep.subr.bf16.mxu0 %v796
    %899 = vmatpush1.bf16.msra.mxu0 %v795
    %900 = vmatprep.subr.bf16.mxu0 %v800
    %901 = vmatpush1.bf16.msra.mxu0 %v799
    %902 = vmatprep.subr.bf16.mxu0 %v804
    %903 = vmatpush1.bf16.msra.mxu0 %v803
    %904 = vmatprep.subr.bf16.mxu0 %v808
    %905 = vmatpush1.bf16.msra.mxu0 %v807
    %906 = vmatprep.subr.bf16.mxu0 %v812
    %907 = vmatpush1.bf16.msra.mxu0 %v811
    %908 = vmatprep.subr.bf16.mxu0 %v816
    %909 = vmatpush1.bf16.msra.mxu0 %v815
    %910 = vmatprep.subr.bf16.mxu0 %v820
    %911 = vmatpush1.bf16.msra.mxu0 %v819
    %912 = vmatprep.subr.bf16.mxu0 0
    %913 = vmatpush1.bf16.msra.mxu0 0
    %914 = vmatprep.subr.bf16.mxu0 0
    %915 = vmatpush1.bf16.msra.mxu0 0
    %916 = vmatprep.subr.bf16.mxu0 0
    %917 = vmatpush1.bf16.msra.mxu0 0
    %918 = vmatprep.subr.bf16.mxu0 0
    %919 = vmatpush1.bf16.msra.mxu0 0
    %920 = vmatprep.subr.bf16.mxu0 0
    %921 = vmatpush1.bf16.msra.mxu0 0
    %922 = vmatprep.subr.bf16.mxu0 0
    %923 = vmatpush1.bf16.msra.mxu0 0
    %924 = vmatprep.subr.bf16.mxu0 0
    %925 = vmatpush1.bf16.msra.mxu0 0
    %926 = vmatprep.subr.bf16.mxu0 0
    %927 = vmatpush1.bf16.msra.mxu0 0
    %928 = vmatprep.mubr.bf16.mxu0 0
    %929 = vmatmul.mubr.bf16.gmra.mrb[0].mxu0 %v692
    %v930 = vpop.f32.mrb[0].mxu0
    %v931 = vadd.f32 0.0, %v930
    %v932 = vpop.f32.mrb[0].mxu0
    %v933 = vadd.f32 0.0, %v932
    %v934 = vpop.f32.mrb[0].mxu0
    %v935 = vadd.f32 0.0, %v934
    %v936 = vpop.f32.mrb[0].mxu0
    %v937 = vadd.f32 0.0, %v936
    %938 = vdwg.mxu0
    %v939 = vadd.f32 %v639, %v888
    %v940 = vadd.f32 %v641, %v890
    %v941 = vadd.f32 %v682, %v931
    %v942 = vadd.f32 %v684, %v933
    %v943 = vadd.f32 %v643, %v892
    %v944 = vadd.f32 %v645, %v894
    %v945 = vadd.f32 %v686, %v935
    %v946 = vadd.f32 %v688, %v937
    %v947 = vld [vmem:[%s5] sm:$0xf]
    %v949 = vlaneseq
    %v950 = vshrl.u32 %v949, 7
    %v951 = vsub.s32 0, %v950
    %v952 = vrot.slane %v947, %v951
    %v953 = vlaneseq
    %v954 = vshrl.u32 %v953, 7
    %v955 = vsub.s32 1, %v954
    %v956 = vrot.slane %v947, %v955
    %v957 = vlaneseq
    %v958 = vshrl.u32 %v957, 7
    %v959 = vsub.s32 2, %v958
    %v960 = vrot.slane %v947, %v959
    %v961 = vlaneseq
    %v962 = vshrl.u32 %v961, 7
    %v963 = vsub.s32 3, %v962
    %v964 = vrot.slane %v947, %v963
    %v969 = vadd.f32 %v939, %v952
    %v970 = vadd.f32 %v940, %v956
    %v971 = vadd.f32 %v941, %v960
    %v972 = vadd.f32 %v942, %v964
    %v973 = vadd.f32 %v943, %v952
    %v974 = vadd.f32 %v944, %v956
    %v975 = vadd.f32 %v945, %v960
    %v976 = vadd.f32 %v946, %v964
    %v977 = vxor.u32 %v969, 2147483648
    %v978 = vxor.u32 %v973, 2147483648
    %v979 = vmul.f32 %v977, 1.442695
    %v980 = vpow.pop %v979
    %v981 = vmul.f32 %v978, 1.442695
    %v982 = vpow.pop %v981
    %v983 = vadd.f32 %v980, 1.0
    %v984 = vadd.f32 %v982, 1.0
    %v985 = vrcp.pop %v983
    %v986 = vmul.f32 1.0, %v985
    %v987 = vrcp.pop %v984
    %v988 = vmul.f32 1.0, %v987
    %v989 = vxor.u32 %v970, 2147483648
    %v990 = vxor.u32 %v974, 2147483648
    %v991 = vmul.f32 %v989, 1.442695
    %v992 = vpow.pop %v991
    %v993 = vmul.f32 %v990, 1.442695
    %v994 = vpow.pop %v993
    %v995 = vadd.f32 %v992, 1.0
    %v996 = vadd.f32 %v994, 1.0
    %v997 = vrcp.pop %v995
    %v998 = vmul.f32 1.0, %v997
    %v999 = vrcp.pop %v996
    %v1000 = vmul.f32 1.0, %v999
    %v1001 = vtanh.pop %v971
    %v1002 = vtanh.pop %v975
    %v1003 = vxor.u32 %v972, 2147483648
    %v1004 = vxor.u32 %v976, 2147483648
    %v1005 = vmul.f32 %v1003, 1.442695
    %v1006 = vpow.pop %v1005
    %v1007 = vmul.f32 %v1004, 1.442695
    %v1008 = vpow.pop %v1007
    %v1009 = vadd.f32 %v1006, 1.0
    %v1010 = vadd.f32 %v1008, 1.0
    %v1011 = vrcp.pop %v1009
    %v1012 = vmul.f32 1.0, %v1011
    %v1013 = vrcp.pop %v1010
    %v1014 = vmul.f32 1.0, %v1013
    %v1015 = vld [vmem:[#allocation8] sm:$0xff]
    %v1016 = vld [vmem:[#allocation8 + $0x8] sm:$0xff]
    %v1017 = vmul.f32 %v998, %v1015
    %v1018 = vmul.f32 %v1000, %v1016
    %v1019 = vmul.f32 %v986, %v1001
    %v1020 = vmul.f32 %v988, %v1002
    %v1021 = vadd.f32 %v1017, %v1019
    %v1022 = vadd.f32 %v1018, %v1020
    %v1023 = vtanh.pop %v1021
    %v1024 = vtanh.pop %v1022
    %v1025 = vmul.f32 %v1012, %v1023
    %v1026 = vmul.f32 %v1014, %v1024
    %1027 = vst [vmem:[#allocation11] sm:$0xff] %v1025
    %1028 = vst [vmem:[#allocation11 + $0x8] sm:$0xff] %v1026
    %1029 = vst [vmem:[#allocation12] sm:$0xff] %v1021
    %1030 = vst [vmem:[#allocation12 + $0x8] sm:$0xff] %v1022
    // Predicated region
    $region46: #{tpu_custom_call.1} parent=1 // pred_check
      _
    $region47: #{tpu_custom_call.1} parent=1 // pred_check_branch
      %1032 = sbr.rel (0) target = $region49
    $region48: #{tpu_custom_call.1} parent=1 // pred_region
      %s1034 = ssub.s32 256, 256
      %1035 = vsyncadd [#allocation4], %s1034
      %s1036 = sshll.u32 [#allocation11], 4
      %s1037 = int_to_ptr.vmem [resolvable:$true] %s1036
      %1042 = dma.vmem_to_hbm [thread:$0]  %s1037, 256, %s6, [#allocation4], 128, 128, 8
    $region49: #{tpu_custom_call.1} parent=1 // pred_fallthru
      _
    // Predicated region
    $region50: #{tpu_custom_call.1} parent=1 // pred_check
      _
    $region51: #{tpu_custom_call.1} parent=1 // pred_check_branch
      %1044 = sbr.rel (0) target = $region53
    $region52: #{tpu_custom_call.1} parent=1 // pred_region
      %s1046 = ssub.s32 256, 256
      %1047 = vsyncadd [#allocation13], %s1046
      %s1048 = sshll.u32 [#allocation12], 4
      %s1049 = int_to_ptr.vmem [resolvable:$true] %s1048
      %1054 = dma.vmem_to_hbm [thread:$0]  %s1049, 256, %s7, [#allocation13], 128, 128, 8
    $region53: #{tpu_custom_call.1} parent=1 // pred_fallthru
      _
    // Predicated region
    $region54: #{tpu_custom_call.1} parent=1 // pred_check
      _
    $region55: #{tpu_custom_call.1} parent=1 // pred_check_branch
      %1056 = sbr.rel (0) target = $region57
    $region56: #{tpu_custom_call.1} parent=1 // pred_region
      %1057 = dma.done [#allocation4], 256
    $region57: #{tpu_custom_call.1} parent=1 // pred_fallthru
      _
    // Predicated region
    $region58: #{tpu_custom_call.1} parent=1 // pred_check
      _
    $region59: #{tpu_custom_call.1} parent=1 // pred_check_branch
      %1059 = sbr.rel (0) target = $region61
    $region60: #{tpu_custom_call.1} parent=1 // pred_region
      %1060 = dma.done [#allocation13], 256
    $region61: #{tpu_custom_call.1} parent=1 // pred_fallthru
      _
    %1061 = vsyncpa [#allocation3], 1
    %1062 = vsyncpa [#allocation6], 1
    %1063 = vsyncpa [#allocation9], 1
    %1064 = vsyncpa [#allocation4], 1
    %1065 = vsyncpa [#allocation13], 1

</llo_original>
